<compile_context>
chip_gen: v7x
topology: tpu7x:2x2x1
jax: 0.10.0
libtpu: 0.0.40
codegen_flags: <defaults>
</compile_context>

<pallas_src>
import numpy as np
import jax
import jax.numpy as jnp
from jax.experimental import pallas as pl
from jax.experimental.pallas import tpu as pltpu


# --------------------------------------------------------------------------
# Kernel bodies
# --------------------------------------------------------------------------

def _separable_kernel_factory(taps_h, taps_w, h, w, pad0, pad1, out_dtype):
    """Separable (1D x 1D) blur. taps_* are static, already-flipped floats."""
    kh, kw = len(taps_h), len(taps_w)
    hp, wp = h + pad0 + pad1, w + pad0 + pad1
    ho, wo = hp - kh + 1, wp - kw + 1

    def kernel(x_ref, o_ref, xpad_ref):
        p = x_ref.shape[-1]
        # Fold zero-padding into the kernel: zero the scratch, write the tile.
        xpad_ref[...] = jnp.zeros((hp, wp, p), jnp.float32)
        xpad_ref[pad0:pad0 + h, pad0:pad0 + w, :] = x_ref[...].astype(jnp.float32)
        xpad = xpad_ref[...]

        # Horizontal 1D pass: shifts along the second-minor (sublane) axis.
        tmp = taps_w[0] * xpad[:, 0:wo, :]
        for j in range(1, kw):
            tmp = tmp + taps_w[j] * xpad[:, j:j + wo, :]

        # Vertical 1D pass: shifts along the third-minor axis (free row offsets).
        acc = taps_h[0] * tmp[0:ho, :, :]
        for i in range(1, kh):
            acc = acc + taps_h[i] * tmp[i:i + ho, :, :]

        o_ref[...] = acc.astype(out_dtype)

    return kernel


def _full2d_kernel_factory(taps2d, h, w, pad0, pad1, out_dtype):
    """Non-separable fallback (kernel given as a 2D array). taps2d is flipped."""
    kh, kw = taps2d.shape
    hp, wp = h + pad0 + pad1, w + pad0 + pad1
    ho, wo = hp - kh + 1, wp - kw + 1

    def kernel(x_ref, o_ref, xpad_ref):
        p = x_ref.shape[-1]
        xpad_ref[...] = jnp.zeros((hp, wp, p), jnp.float32)
        xpad_ref[pad0:pad0 + h, pad0:pad0 + w, :] = x_ref[...].astype(jnp.float32)
        xpad = xpad_ref[...]

        acc = jnp.zeros((ho, wo, p), jnp.float32)
        for i in range(kh):
            for j in range(kw):
                acc = acc + float(taps2d[i, j]) * xpad[i:i + ho, j:j + wo, :]
        o_ref[...] = acc.astype(out_dtype)

    return kernel


# --------------------------------------------------------------------------
# Block sizing
# --------------------------------------------------------------------------

_VMEM_LIMIT_BYTES = 48 * 1024 * 1024   # safe on v5e/v6e (128 MiB) and v7x (64 MiB)
_VMEM_BUDGET = 24 * 1024 * 1024        # what we size blocks against (headroom)


def _choose_plane_tile(nc, h, w, hp, wp, ho, wo, itemsize):
    """Pick how many (n, c) planes to process per grid step (lane tile)."""

    def vmem_bytes(p):
        in_blk = h * w * p * itemsize
        out_blk = ho * wo * p * itemsize
        xpad = hp * wp * p * 4        # padded-plane scratch (f32)
        tmp = hp * wo * p * 4         # intermediate of the horizontal pass (f32)
        return 2 * (in_blk + out_blk) + xpad + tmp   # 2x: double-buffered DMA

    if vmem_bytes(nc) <= _VMEM_BUDGET:
        return nc, nc                  # all planes in one lane-dense block
    # Otherwise tile the lane axis in multiples of 128 planes.
    per_plane = max(1, vmem_bytes(1))
    p = (_VMEM_BUDGET // per_plane) // 128 * 128
    p = max(128, min(p, 2048))
    # TODO(synk): for very large spatial extents (p=128 still over budget) add
    # H-tiling with a (kh-1) halo instead of relying on a bigger VMEM limit.
    nc_pad = -(-nc // p) * p
    return p, nc_pad


# --------------------------------------------------------------------------
# Wrapper
# --------------------------------------------------------------------------

def blur_pallas(x, blur):
    """upfirdn2d(x, k, up=1, down=1, pad=blur.pad) in NCHW, depthwise."""
    n, c, h, w = x.shape
    pad0, pad1 = blur.pad
    assert pad0 >= 0 and pad1 >= 0, "negative (crop) pads not supported"

    if blur.taps2d is None:
        kh, kw = len(blur.taps_h), len(blur.taps_w)
    else:
        kh, kw = blur.taps2d.shape
    hp, wp = h + pad0 + pad1, w + pad0 + pad1
    ho, wo = hp - kh + 1, wp - kw + 1
    assert ho > 0 and wo > 0, "padding/kernel combination yields empty output"

    nc = n * c
    # Channels-last: planes on the lane axis, FIR shifts stay off the lanes.
    xt = jnp.transpose(x.reshape(nc, h, w), (1, 2, 0))          # (H, W, NC)

    itemsize = jnp.dtype(x.dtype).itemsize
    p, nc_pad = _choose_plane_tile(nc, h, w, hp, wp, ho, wo, itemsize)
    if nc_pad != nc:
        xt = jnp.pad(xt, ((0, 0), (0, 0), (0, nc_pad - nc)))

    if blur.taps2d is None:
        body = _separable_kernel_factory(blur.taps_h, blur.taps_w,
                                         h, w, pad0, pad1, x.dtype)
    else:
        body = _full2d_kernel_factory(blur.taps2d, h, w, pad0, pad1, x.dtype)

    out = pl.pallas_call(
        body,
        out_shape=jax.ShapeDtypeStruct((ho, wo, nc_pad), x.dtype),
        grid_spec=pltpu.PrefetchScalarGridSpec(
            num_scalar_prefetch=0,
            grid=(nc_pad // p,),
            in_specs=[pl.BlockSpec((h, w, p), lambda b: (0, 0, b))],
            out_specs=pl.BlockSpec((ho, wo, p), lambda b: (0, 0, b)),
            scratch_shapes=[pltpu.VMEM((hp, wp, p), jnp.float32)],
        ),
        compiler_params=pltpu.CompilerParams(
            dimension_semantics=("parallel",),
            vmem_limit_bytes=_VMEM_LIMIT_BYTES),
    )(xt)

    out = out[:, :, :nc]                       # drop lane padding (if any)
    out = jnp.transpose(out, (2, 0, 1))        # (NC, Ho, Wo)
    return out.reshape(n, c, ho, wo)


# --------------------------------------------------------------------------
# Module port
# --------------------------------------------------------------------------

class Blur:
    """JAX/Pallas port of the PyTorch Blur module (forward pass only)."""

    def __init__(self, kernel, pad, upsample_factor=1):
        self.pad = (int(pad[0]), int(pad[1]))
        k = np.asarray(kernel, dtype=np.float32)
        scale = float(upsample_factor) ** 2 if upsample_factor > 1 else 1.0

        if k.ndim == 1:
            # outer(k, k) / sum(outer) == outer(k/sum(k), k/sum(k)); scale on one factor.
            k1 = k / k.sum()
            # upfirdn2d convolves with the flipped kernel -> flip each 1D factor.
            self.taps_h = tuple(float(v) for v in (k1 * scale)[::-1])
            self.taps_w = tuple(float(v) for v in k1[::-1])
            self.taps2d = None
            self.kernel2d = np.outer(k1 * scale, k1)       # unflipped (reference)
        else:
            k2 = (k / k.sum()) * scale
            self.taps_h = self.taps_w = None
            self.taps2d = np.ascontiguousarray(k2[::-1, ::-1])  # flipped (kernel)
            self.kernel2d = k2                                  # unflipped (reference)

    def __call__(self, x):
        return blur_pallas(x, self)


# --------------------------------------------------------------------------
# Pure-numpy reference (upfirdn2d with up=1, down=1)
# --------------------------------------------------------------------------

def _reference_blur_numpy(x, kernel2d, pad):
    x = np.asarray(x, np.float32)
    n, c, h, w = x.shape
    pad0, pad1 = pad
    kh, kw = kernel2d.shape
    xp = np.pad(x, ((0, 0), (0, 0), (pad0, pad1), (pad0, pad1)))
    kf = np.asarray(kernel2d, np.float32)[::-1, ::-1]   # true convolution
    ho, wo = h + pad0 + pad1 - kh + 1, w + pad0 + pad1 - kw + 1
    out = np.zeros((n, c, ho, wo), np.float32)
    for i in range(kh):
        for j in range(kw):
            out += kf[i, j] * xp[:, :, i:i + ho, j:j + wo]
    return out


if __name__ == "__main__":
    key = jax.random.PRNGKey(0)
    N, C, H, W = 2, 4, 16, 16
    x = jax.random.normal(key, (N, C, H, W), dtype=jnp.float32)

    # Typical StyleGAN blur: 1D kernel [1,3,3,1], pad=(2,1) -> output 16x16.
    blur = Blur(kernel=[1, 3, 3, 1], pad=(2, 1), upsample_factor=1)

    out = jax.block_until_ready(blur(x))

    ref = _reference_blur_numpy(np.asarray(x), blur.kernel2d, blur.pad)
    assert out.shape == (N, C, H, W), out.shape
    np.testing.assert_allclose(np.asarray(out), ref, rtol=1e-5, atol=1e-5)

    print("KERNEL_OK")
</pallas_src>

<mosaic_0001>
module attributes {stable_mosaic.version = 11 : i64} {
  func.func @kernel(%arg0: i32, %arg1: memref<16x16x8xf32, #tpu.memory_space<vmem>>, %arg2: memref<16x16x8xf32, #tpu.memory_space<vmem>>, %arg3: memref<19x19x8xf32, #tpu.memory_space<vmem>>) attributes {dimension_semantics = [#tpu.dimension_semantics<parallel>], iteration_bounds = array<i64: 1>, scalar_prefetch = 0 : i64, scratch_operands = 1 : i64, tpu.core_type = #tpu.core_type<tc>, window_params = [{transform_indices = @transform_0, window_bounds = array<i64: 16, 16, 8>}, {transform_indices = @transform_1, window_bounds = array<i64: 16, 16, 8>}]} {
    %cst = arith.constant 0.000000e+00 : f32
    %0 = vector.broadcast %cst : f32 to vector<19x19x8xf32>
    %c0 = arith.constant 0 : index
    %c0_0 = arith.constant 0 : index
    %c0_1 = arith.constant 0 : index
    %1 = vector.load %arg3[%c0, %c0_0, %c0_1] : memref<19x19x8xf32, #tpu.memory_space<vmem>>, vector<19x19x8xf32>
    tpu.vector_store %arg3[%c0, %c0_0, %c0_1], %0 {strides = array<i32>} : memref<19x19x8xf32, #tpu.memory_space<vmem>>, vector<19x19x8xf32>,
    %c0_2 = arith.constant 0 : index
    %c0_3 = arith.constant 0 : index
    %c0_4 = arith.constant 0 : index
    %2 = vector.load %arg1[%c0_2, %c0_3, %c0_4] : memref<16x16x8xf32, #tpu.memory_space<vmem>>, vector<16x16x8xf32>
    %c2 = arith.constant 2 : index
    %c2_5 = arith.constant 2 : index
    %c0_6 = arith.constant 0 : index
    %3 = vector.load %arg3[%c2, %c2_5, %c0_6] : memref<19x19x8xf32, #tpu.memory_space<vmem>>, vector<16x16x8xf32>
    tpu.vector_store %arg3[%c2, %c2_5, %c0_6], %2 {strides = array<i32>} : memref<19x19x8xf32, #tpu.memory_space<vmem>>, vector<16x16x8xf32>,
    %c0_7 = arith.constant 0 : index
    %c0_8 = arith.constant 0 : index
    %c0_9 = arith.constant 0 : index
    %4 = vector.load %arg3[%c0_7, %c0_8, %c0_9] : memref<19x19x8xf32, #tpu.memory_space<vmem>>, vector<19x19x8xf32>
    %5 = vector.extract_strided_slice %4 {offsets = [0, 0, 0], sizes = [19, 16, 8], strides = [1, 1, 1]} : vector<19x19x8xf32> to vector<19x16x8xf32>
    %cst_10 = arith.constant 1.250000e-01 : f32
    %6 = vector.broadcast %cst_10 : f32 to vector<19x16x8xf32>
    %7 = arith.mulf %6, %5 : vector<19x16x8xf32>
    %8 = vector.extract_strided_slice %4 {offsets = [0, 1, 0], sizes = [19, 16, 8], strides = [1, 1, 1]} : vector<19x19x8xf32> to vector<19x16x8xf32>
    %cst_11 = arith.constant 3.750000e-01 : f32
    %9 = vector.broadcast %cst_11 : f32 to vector<19x16x8xf32>
    %10 = arith.mulf %9, %8 : vector<19x16x8xf32>
    %11 = arith.addf %7, %10 : vector<19x16x8xf32>
    %12 = vector.extract_strided_slice %4 {offsets = [0, 2, 0], sizes = [19, 16, 8], strides = [1, 1, 1]} : vector<19x19x8xf32> to vector<19x16x8xf32>
    %cst_12 = arith.constant 3.750000e-01 : f32
    %13 = vector.broadcast %cst_12 : f32 to vector<19x16x8xf32>
    %14 = arith.mulf %13, %12 : vector<19x16x8xf32>
    %15 = arith.addf %11, %14 : vector<19x16x8xf32>
    %16 = vector.extract_strided_slice %4 {offsets = [0, 3, 0], sizes = [19, 16, 8], strides = [1, 1, 1]} : vector<19x19x8xf32> to vector<19x16x8xf32>
    %cst_13 = arith.constant 1.250000e-01 : f32
    %17 = vector.broadcast %cst_13 : f32 to vector<19x16x8xf32>
    %18 = arith.mulf %17, %16 : vector<19x16x8xf32>
    %19 = arith.addf %15, %18 : vector<19x16x8xf32>
    %20 = vector.extract_strided_slice %19 {offsets = [0, 0, 0], sizes = [16, 16, 8], strides = [1, 1, 1]} : vector<19x16x8xf32> to vector<16x16x8xf32>
    %cst_14 = arith.constant 1.250000e-01 : f32
    %21 = vector.broadcast %cst_14 : f32 to vector<16x16x8xf32>
    %22 = arith.mulf %21, %20 : vector<16x16x8xf32>
    %23 = vector.extract_strided_slice %19 {offsets = [1, 0, 0], sizes = [16, 16, 8], strides = [1, 1, 1]} : vector<19x16x8xf32> to vector<16x16x8xf32>
    %cst_15 = arith.constant 3.750000e-01 : f32
    %24 = vector.broadcast %cst_15 : f32 to vector<16x16x8xf32>
    %25 = arith.mulf %24, %23 : vector<16x16x8xf32>
    %26 = arith.addf %22, %25 : vector<16x16x8xf32>
    %27 = vector.extract_strided_slice %19 {offsets = [2, 0, 0], sizes = [16, 16, 8], strides = [1, 1, 1]} : vector<19x16x8xf32> to vector<16x16x8xf32>
    %cst_16 = arith.constant 3.750000e-01 : f32
    %28 = vector.broadcast %cst_16 : f32 to vector<16x16x8xf32>
    %29 = arith.mulf %28, %27 : vector<16x16x8xf32>
    %30 = arith.addf %26, %29 : vector<16x16x8xf32>
    %31 = vector.extract_strided_slice %19 {offsets = [3, 0, 0], sizes = [16, 16, 8], strides = [1, 1, 1]} : vector<19x16x8xf32> to vector<16x16x8xf32>
    %cst_17 = arith.constant 1.250000e-01 : f32
    %32 = vector.broadcast %cst_17 : f32 to vector<16x16x8xf32>
    %33 = arith.mulf %32, %31 : vector<16x16x8xf32>
    %34 = arith.addf %30, %33 : vector<16x16x8xf32>
    %c0_18 = arith.constant 0 : index
    %c0_19 = arith.constant 0 : index
    %c0_20 = arith.constant 0 : index
    %35 = vector.load %arg2[%c0_18, %c0_19, %c0_20] : memref<16x16x8xf32, #tpu.memory_space<vmem>>, vector<16x16x8xf32>
    tpu.vector_store %arg2[%c0_18, %c0_19, %c0_20], %34 {strides = array<i32>} : memref<16x16x8xf32, #tpu.memory_space<vmem>>, vector<16x16x8xf32>,
    return
  }
  func.func @transform_0(%arg0: i32) -> (i32, i32, i32) {
    %c0_i32 = arith.constant 0 : i32
    %c0_i32_0 = arith.constant 0 : i32
    %c0_i32_1 = arith.constant 0 : i32
    return %c0_i32, %c0_i32_0, %arg0 : i32, i32, i32
  }
  func.func @transform_1(%arg0: i32) -> (i32, i32, i32) {
    %c0_i32 = arith.constant 0 : i32
    %c0_i32_0 = arith.constant 0 : i32
    %c0_i32_1 = arith.constant 0 : i32
    return %c0_i32, %c0_i32_0, %arg0 : i32, i32, i32
  }
}

</mosaic_0001>

<llo_original>
// kernel: tpu_custom_call.1
$region0: #{tpu_custom_call.1}
  #allocation0 [shape = 'u32[]', space=smem, size = 0x4, offset = 0x4, fixed_abs, tag = 'smem constant byte address 0x4 - core index']
  #allocation1 [shape = 'u32[144,128]{1,0:T(1,128)}', space=vmem, size = 0x12000, scoped, tag = 'internal scratch']
  #allocation2 [shape = 'f32[19,19,8]{2,1,0:T(8,128)}', space=vmem, size = 0x39000, scoped, tag = 'scratch operand']
  %s0 = inlined_call_operand.vmem [shape: f32[16,16,8], index: 0, kind: input, shape index: {}]
  %s1 = inlined_call_operand.vmem [shape: f32[16,16,8], index: 1, kind: output, shape index: {}]
  %s2 = sld [smem:[#allocation0]]
  $region14: #{tpu_custom_call.1} parent=0
    _
  %s4 = ssub.s32 1, %s2
  %s5 = scalar_select 0, %s4, %s2
  // Predicated region
  $region2: #{tpu_custom_call.1} parent=0 // pred_check
    _
  $region3: #{tpu_custom_call.1} parent=0 // pred_check_branch
    %7 = sbr.rel (0) target = $region5
  $region4: #{tpu_custom_call.1} parent=0 // pred_region
    _
  $region5: #{tpu_custom_call.1} parent=0 // pred_fallthru
    _
  %vm8 = vcmask 64512
  %9 = vst.msk [vmem:[#allocation2] sm:$0xff] %vm8, 0.0
  %10 = vst.msk [vmem:[#allocation2 + $0x8] sm:$0xff] %vm8, 0.0
  %vm11 = vcmask 59392
  %12 = vst.msk [vmem:[#allocation2 + $0x10] sm:$0x7] %vm11, 0.0
  %13 = vst.msk [vmem:[#allocation2 + $0x18] sm:$0xff] %vm8, 0.0
  %14 = vst.msk [vmem:[#allocation2 + $0x20] sm:$0xff] %vm8, 0.0
  %15 = vst.msk [vmem:[#allocation2 + $0x28] sm:$0x7] %vm11, 0.0
  %16 = vst.msk [vmem:[#allocation2 + $0x30] sm:$0xff] %vm8, 0.0
  %17 = vst.msk [vmem:[#allocation2 + $0x38] sm:$0xff] %vm8, 0.0
  %18 = vst.msk [vmem:[#allocation2 + $0x40] sm:$0x7] %vm11, 0.0
  %19 = vst.msk [vmem:[#allocation2 + $0x48] sm:$0xff] %vm8, 0.0
  %20 = vst.msk [vmem:[#allocation2 + $0x50] sm:$0xff] %vm8, 0.0
  %21 = vst.msk [vmem:[#allocation2 + $0x58] sm:$0x7] %vm11, 0.0
  %22 = vst.msk [vmem:[#allocation2 + $0x60] sm:$0xff] %vm8, 0.0
  %23 = vst.msk [vmem:[#allocation2 + $0x68] sm:$0xff] %vm8, 0.0
  %24 = vst.msk [vmem:[#allocation2 + $0x70] sm:$0x7] %vm11, 0.0
  %25 = vst.msk [vmem:[#allocation2 + $0x78] sm:$0xff] %vm8, 0.0
  %26 = vst.msk [vmem:[#allocation2 + $0x80] sm:$0xff] %vm8, 0.0
  %27 = vst.msk [vmem:[#allocation2 + $0x88] sm:$0x7] %vm11, 0.0
  %28 = vst.msk [vmem:[#allocation2 + $0x90] sm:$0xff] %vm8, 0.0
  %29 = vst.msk [vmem:[#allocation2 + $0x98] sm:$0xff] %vm8, 0.0
  %30 = vst.msk [vmem:[#allocation2 + $0xa0] sm:$0x7] %vm11, 0.0
  %31 = vst.msk [vmem:[#allocation2 + $0xa8] sm:$0xff] %vm8, 0.0
  %32 = vst.msk [vmem:[#allocation2 + $0xb0] sm:$0xff] %vm8, 0.0
  %33 = vst.msk [vmem:[#allocation2 + $0xb8] sm:$0x7] %vm11, 0.0
  %34 = vst.msk [vmem:[#allocation2 + $0xc0] sm:$0xff] %vm8, 0.0
  %35 = vst.msk [vmem:[#allocation2 + $0xc8] sm:$0xff] %vm8, 0.0
  %36 = vst.msk [vmem:[#allocation2 + $0xd0] sm:$0x7] %vm11, 0.0
  %37 = vst.msk [vmem:[#allocation2 + $0xd8] sm:$0xff] %vm8, 0.0
  %38 = vst.msk [vmem:[#allocation2 + $0xe0] sm:$0xff] %vm8, 0.0
  %39 = vst.msk [vmem:[#allocation2 + $0xe8] sm:$0x7] %vm11, 0.0
  %40 = vst.msk [vmem:[#allocation2 + $0xf0] sm:$0xff] %vm8, 0.0
  %41 = vst.msk [vmem:[#allocation2 + $0xf8] sm:$0xff] %vm8, 0.0
  %42 = vst.msk [vmem:[#allocation2 + $0x100] sm:$0x7] %vm11, 0.0
  %43 = vst.msk [vmem:[#allocation2 + $0x108] sm:$0xff] %vm8, 0.0
  %44 = vst.msk [vmem:[#allocation2 + $0x110] sm:$0xff] %vm8, 0.0
  %45 = vst.msk [vmem:[#allocation2 + $0x118] sm:$0x7] %vm11, 0.0
  %46 = vst.msk [vmem:[#allocation2 + $0x120] sm:$0xff] %vm8, 0.0
  %47 = vst.msk [vmem:[#allocation2 + $0x128] sm:$0xff] %vm8, 0.0
  %48 = vst.msk [vmem:[#allocation2 + $0x130] sm:$0x7] %vm11, 0.0
  %49 = vst.msk [vmem:[#allocation2 + $0x138] sm:$0xff] %vm8, 0.0
  %50 = vst.msk [vmem:[#allocation2 + $0x140] sm:$0xff] %vm8, 0.0
  %51 = vst.msk [vmem:[#allocation2 + $0x148] sm:$0x7] %vm11, 0.0
  %52 = vst.msk [vmem:[#allocation2 + $0x150] sm:$0xff] %vm8, 0.0
  %53 = vst.msk [vmem:[#allocation2 + $0x158] sm:$0xff] %vm8, 0.0
  %54 = vst.msk [vmem:[#allocation2 + $0x160] sm:$0x7] %vm11, 0.0
  %55 = vst.msk [vmem:[#allocation2 + $0x168] sm:$0xff] %vm8, 0.0
  %56 = vst.msk [vmem:[#allocation2 + $0x170] sm:$0xff] %vm8, 0.0
  %57 = vst.msk [vmem:[#allocation2 + $0x178] sm:$0x7] %vm11, 0.0
  %58 = vst.msk [vmem:[#allocation2 + $0x180] sm:$0xff] %vm8, 0.0
  %59 = vst.msk [vmem:[#allocation2 + $0x188] sm:$0xff] %vm8, 0.0
  %60 = vst.msk [vmem:[#allocation2 + $0x190] sm:$0x7] %vm11, 0.0
  %61 = vst.msk [vmem:[#allocation2 + $0x198] sm:$0xff] %vm8, 0.0
  %62 = vst.msk [vmem:[#allocation2 + $0x1a0] sm:$0xff] %vm8, 0.0
  %63 = vst.msk [vmem:[#allocation2 + $0x1a8] sm:$0x7] %vm11, 0.0
  %64 = vst.msk [vmem:[#allocation2 + $0x1b0] sm:$0xff] %vm8, 0.0
  %65 = vst.msk [vmem:[#allocation2 + $0x1b8] sm:$0xff] %vm8, 0.0
  %66 = vst.msk [vmem:[#allocation2 + $0x1c0] sm:$0x7] %vm11, 0.0
  %v67 = vld [vmem:[%s0] sm:$0xff]
  %v68 = vld [vmem:[%s0 + $0x8] sm:$0xff]
  %v69 = vld [vmem:[%s0 + $0x10] sm:$0xff]
  %v70 = vld [vmem:[%s0 + $0x18] sm:$0xff]
  %v71 = vld [vmem:[%s0 + $0x20] sm:$0xff]
  %v72 = vld [vmem:[%s0 + $0x28] sm:$0xff]
  %v73 = vld [vmem:[%s0 + $0x30] sm:$0xff]
  %v74 = vld [vmem:[%s0 + $0x38] sm:$0xff]
  %v75 = vld [vmem:[%s0 + $0x40] sm:$0xff]
  %v76 = vld [vmem:[%s0 + $0x48] sm:$0xff]
  %v77 = vld [vmem:[%s0 + $0x50] sm:$0xff]
  %v78 = vld [vmem:[%s0 + $0x58] sm:$0xff]
  %v79 = vld [vmem:[%s0 + $0x60] sm:$0xff]
  %v80 = vld [vmem:[%s0 + $0x68] sm:$0xff]
  %v81 = vld [vmem:[%s0 + $0x70] sm:$0xff]
  %v82 = vld [vmem:[%s0 + $0x78] sm:$0xff]
  %v83 = vld [vmem:[%s0 + $0x80] sm:$0xff]
  %v84 = vld [vmem:[%s0 + $0x88] sm:$0xff]
  %v85 = vld [vmem:[%s0 + $0x90] sm:$0xff]
  %v86 = vld [vmem:[%s0 + $0x98] sm:$0xff]
  %v87 = vld [vmem:[%s0 + $0xa0] sm:$0xff]
  %v88 = vld [vmem:[%s0 + $0xa8] sm:$0xff]
  %v89 = vld [vmem:[%s0 + $0xb0] sm:$0xff]
  %v90 = vld [vmem:[%s0 + $0xb8] sm:$0xff]
  %v91 = vld [vmem:[%s0 + $0xc0] sm:$0xff]
  %v92 = vld [vmem:[%s0 + $0xc8] sm:$0xff]
  %v93 = vld [vmem:[%s0 + $0xd0] sm:$0xff]
  %v94 = vld [vmem:[%s0 + $0xd8] sm:$0xff]
  %v95 = vld [vmem:[%s0 + $0xe0] sm:$0xff]
  %v96 = vld [vmem:[%s0 + $0xe8] sm:$0xff]
  %v97 = vld [vmem:[%s0 + $0xf0] sm:$0xff]
  %v98 = vld [vmem:[%s0 + $0xf8] sm:$0xff]
  %s99 = scalar_lea.vmem [#allocation2], 48
  %100 = vst.msk [vmem:[%s99 + $0x2] sm:$0xff] %vm8, %v67
  %101 = vst.msk [vmem:[%s99 + $0xa] sm:$0xff] %vm8, %v68
  %102 = vst.msk [vmem:[%s99 + $0x1a] sm:$0xff] %vm8, %v69
  %103 = vst.msk [vmem:[%s99 + $0x22] sm:$0xff] %vm8, %v70
  %104 = vst.msk [vmem:[%s99 + $0x32] sm:$0xff] %vm8, %v71
  %105 = vst.msk [vmem:[%s99 + $0x3a] sm:$0xff] %vm8, %v72
  %106 = vst.msk [vmem:[%s99 + $0x4a] sm:$0xff] %vm8, %v73
  %107 = vst.msk [vmem:[%s99 + $0x52] sm:$0xff] %vm8, %v74
  %108 = vst.msk [vmem:[%s99 + $0x62] sm:$0xff] %vm8, %v75
  %109 = vst.msk [vmem:[%s99 + $0x6a] sm:$0xff] %vm8, %v76
  %110 = vst.msk [vmem:[%s99 + $0x7a] sm:$0xff] %vm8, %v77
  %111 = vst.msk [vmem:[%s99 + $0x82] sm:$0xff] %vm8, %v78
  %112 = vst.msk [vmem:[%s99 + $0x92] sm:$0xff] %vm8, %v79
  %113 = vst.msk [vmem:[%s99 + $0x9a] sm:$0xff] %vm8, %v80
  %114 = vst.msk [vmem:[%s99 + $0xaa] sm:$0xff] %vm8, %v81
  %115 = vst.msk [vmem:[%s99 + $0xb2] sm:$0xff] %vm8, %v82
  %116 = vst.msk [vmem:[%s99 + $0xc2] sm:$0xff] %vm8, %v83
  %117 = vst.msk [vmem:[%s99 + $0xca] sm:$0xff] %vm8, %v84
  %118 = vst.msk [vmem:[%s99 + $0xda] sm:$0xff] %vm8, %v85
  %119 = vst.msk [vmem:[%s99 + $0xe2] sm:$0xff] %vm8, %v86
  %120 = vst.msk [vmem:[%s99 + $0xf2] sm:$0xff] %vm8, %v87
  %121 = vst.msk [vmem:[%s99 + $0xfa] sm:$0xff] %vm8, %v88
  %122 = vst.msk [vmem:[%s99 + $0x10a] sm:$0xff] %vm8, %v89
  %123 = vst.msk [vmem:[%s99 + $0x112] sm:$0xff] %vm8, %v90
  %124 = vst.msk [vmem:[%s99 + $0x122] sm:$0xff] %vm8, %v91
  %125 = vst.msk [vmem:[%s99 + $0x12a] sm:$0xff] %vm8, %v92
  %126 = vst.msk [vmem:[%s99 + $0x13a] sm:$0xff] %vm8, %v93
  %127 = vst.msk [vmem:[%s99 + $0x142] sm:$0xff] %vm8, %v94
  %128 = vst.msk [vmem:[%s99 + $0x152] sm:$0xff] %vm8, %v95
  %129 = vst.msk [vmem:[%s99 + $0x15a] sm:$0xff] %vm8, %v96
  %130 = vst.msk [vmem:[%s99 + $0x16a] sm:$0xff] %vm8, %v97
  %131 = vst.msk [vmem:[%s99 + $0x172] sm:$0xff] %vm8, %v98
  %v132 = vld [vmem:[#allocation2] sm:$0xff]
  %v133 = vld [vmem:[#allocation2 + $0x8] sm:$0xff]
  %v134 = vld [vmem:[#allocation2 + $0x10] sm:$0x7]
  %v135 = vld [vmem:[#allocation2 + $0x18] sm:$0xff]
  %v136 = vld [vmem:[#allocation2 + $0x20] sm:$0xff]
  %v137 = vld [vmem:[#allocation2 + $0x28] sm:$0x7]
  %v138 = vld [vmem:[#allocation2 + $0x30] sm:$0xff]
  %v139 = vld [vmem:[#allocation2 + $0x38] sm:$0xff]
  %v140 = vld [vmem:[#allocation2 + $0x40] sm:$0x7]
  %v141 = vld [vmem:[#allocation2 + $0x48] sm:$0xff]
  %v142 = vld [vmem:[#allocation2 + $0x50] sm:$0xff]
  %v143 = vld [vmem:[#allocation2 + $0x58] sm:$0x7]
  %v144 = vld [vmem:[#allocation2 + $0x60] sm:$0xff]
  %v145 = vld [vmem:[#allocation2 + $0x68] sm:$0xff]
  %v146 = vld [vmem:[#allocation2 + $0x70] sm:$0x7]
  %v147 = vld [vmem:[#allocation2 + $0x78] sm:$0xff]
  %v148 = vld [vmem:[#allocation2 + $0x80] sm:$0xff]
  %v149 = vld [vmem:[#allocation2 + $0x88] sm:$0x7]
  %v150 = vld [vmem:[#allocation2 + $0x90] sm:$0xff]
  %v151 = vld [vmem:[#allocation2 + $0x98] sm:$0xff]
  %v152 = vld [vmem:[#allocation2 + $0xa0] sm:$0x7]
  %v153 = vld [vmem:[#allocation2 + $0xa8] sm:$0xff]
  %v154 = vld [vmem:[#allocation2 + $0xb0] sm:$0xff]
  %v155 = vld [vmem:[#allocation2 + $0xb8] sm:$0x7]
  %v156 = vld [vmem:[#allocation2 + $0xc0] sm:$0xff]
  %v157 = vld [vmem:[#allocation2 + $0xc8] sm:$0xff]
  %v158 = vld [vmem:[#allocation2 + $0xd0] sm:$0x7]
  %v159 = vld [vmem:[#allocation2 + $0xd8] sm:$0xff]
  %v160 = vld [vmem:[#allocation2 + $0xe0] sm:$0xff]
  %v161 = vld [vmem:[#allocation2 + $0xe8] sm:$0x7]
  %v162 = vld [vmem:[#allocation2 + $0xf0] sm:$0xff]
  %v163 = vld [vmem:[#allocation2 + $0xf8] sm:$0xff]
  %v164 = vld [vmem:[#allocation2 + $0x100] sm:$0x7]
  %v165 = vld [vmem:[#allocation2 + $0x108] sm:$0xff]
  %v166 = vld [vmem:[#allocation2 + $0x110] sm:$0xff]
  %v167 = vld [vmem:[#allocation2 + $0x118] sm:$0x7]
  %v168 = vld [vmem:[#allocation2 + $0x120] sm:$0xff]
  %v169 = vld [vmem:[#allocation2 + $0x128] sm:$0xff]
  %v170 = vld [vmem:[#allocation2 + $0x130] sm:$0x7]
  %v171 = vld [vmem:[#allocation2 + $0x138] sm:$0xff]
  %v172 = vld [vmem:[#allocation2 + $0x140] sm:$0xff]
  %v173 = vld [vmem:[#allocation2 + $0x148] sm:$0x7]
  %v174 = vld [vmem:[#allocation2 + $0x150] sm:$0xff]
  %v175 = vld [vmem:[#allocation2 + $0x158] sm:$0xff]
  %v176 = vld [vmem:[#allocation2 + $0x160] sm:$0x7]
  %v177 = vld [vmem:[#allocation2 + $0x168] sm:$0xff]
  %v178 = vld [vmem:[#allocation2 + $0x170] sm:$0xff]
  %v179 = vld [vmem:[#allocation2 + $0x178] sm:$0x7]
  %v180 = vld [vmem:[#allocation2 + $0x180] sm:$0xff]
  %v181 = vld [vmem:[#allocation2 + $0x188] sm:$0xff]
  %v182 = vld [vmem:[#allocation2 + $0x190] sm:$0x7]
  %v183 = vld [vmem:[#allocation2 + $0x198] sm:$0xff]
  %v184 = vld [vmem:[#allocation2 + $0x1a0] sm:$0xff]
  %v185 = vld [vmem:[#allocation2 + $0x1a8] sm:$0x7]
  %v186 = vld [vmem:[#allocation2 + $0x1b0] sm:$0xff]
  %v187 = vld [vmem:[#allocation2 + $0x1b8] sm:$0xff]
  %v188 = vld [vmem:[#allocation2 + $0x1c0] sm:$0x7]
  %v189 = vmul.f32 %v132, 0.125
  %v190 = vmul.f32 %v133, 0.125
  %v191 = vmul.f32 %v135, 0.125
  %v192 = vmul.f32 %v136, 0.125
  %v193 = vmul.f32 %v138, 0.125
  %v194 = vmul.f32 %v139, 0.125
  %v195 = vmul.f32 %v141, 0.125
  %v196 = vmul.f32 %v142, 0.125
  %v197 = vmul.f32 %v144, 0.125
  %v198 = vmul.f32 %v145, 0.125
  %v199 = vmul.f32 %v147, 0.125
  %v200 = vmul.f32 %v148, 0.125
  %v201 = vmul.f32 %v150, 0.125
  %v202 = vmul.f32 %v151, 0.125
  %v203 = vmul.f32 %v153, 0.125
  %v204 = vmul.f32 %v154, 0.125
  %v205 = vmul.f32 %v156, 0.125
  %v206 = vmul.f32 %v157, 0.125
  %v207 = vmul.f32 %v159, 0.125
  %v208 = vmul.f32 %v160, 0.125
  %v209 = vmul.f32 %v162, 0.125
  %v210 = vmul.f32 %v163, 0.125
  %v211 = vmul.f32 %v165, 0.125
  %v212 = vmul.f32 %v166, 0.125
  %v213 = vmul.f32 %v168, 0.125
  %v214 = vmul.f32 %v169, 0.125
  %v215 = vmul.f32 %v171, 0.125
  %v216 = vmul.f32 %v172, 0.125
  %v217 = vmul.f32 %v174, 0.125
  %v218 = vmul.f32 %v175, 0.125
  %v219 = vmul.f32 %v177, 0.125
  %v220 = vmul.f32 %v178, 0.125
  %v221 = vmul.f32 %v180, 0.125
  %v222 = vmul.f32 %v181, 0.125
  %v223 = vmul.f32 %v183, 0.125
  %v224 = vmul.f32 %v184, 0.125
  %v225 = vmul.f32 %v186, 0.125
  %v226 = vmul.f32 %v187, 0.125
  %v227 = vmul.f32 %v132, 0.375
  %v228 = vmul.f32 %v133, 0.375
  %v229 = vmul.f32 %v134, 0.375
  %v230 = vmul.f32 %v135, 0.375
  %v231 = vmul.f32 %v136, 0.375
  %v232 = vmul.f32 %v137, 0.375
  %v233 = vmul.f32 %v138, 0.375
  %v234 = vmul.f32 %v139, 0.375
  %v235 = vmul.f32 %v140, 0.375
  %v236 = vmul.f32 %v141, 0.375
  %v237 = vmul.f32 %v142, 0.375
  %v238 = vmul.f32 %v143, 0.375
  %v239 = vmul.f32 %v144, 0.375
  %v240 = vmul.f32 %v145, 0.375
  %v241 = vmul.f32 %v146, 0.375
  %v242 = vmul.f32 %v147, 0.375
  %v243 = vmul.f32 %v148, 0.375
  %v244 = vmul.f32 %v149, 0.375
  %v245 = vmul.f32 %v150, 0.375
  %v246 = vmul.f32 %v151, 0.375
  %v247 = vmul.f32 %v152, 0.375
  %v248 = vmul.f32 %v153, 0.375
  %v249 = vmul.f32 %v154, 0.375
  %v250 = vmul.f32 %v155, 0.375
  %v251 = vmul.f32 %v156, 0.375
  %v252 = vmul.f32 %v157, 0.375
  %v253 = vmul.f32 %v158, 0.375
  %v254 = vmul.f32 %v159, 0.375
  %v255 = vmul.f32 %v160, 0.375
  %v256 = vmul.f32 %v161, 0.375
  %v257 = vmul.f32 %v162, 0.375
  %v258 = vmul.f32 %v163, 0.375
  %v259 = vmul.f32 %v164, 0.375
  %v260 = vmul.f32 %v165, 0.375
  %v261 = vmul.f32 %v166, 0.375
  %v262 = vmul.f32 %v167, 0.375
  %v263 = vmul.f32 %v168, 0.375
  %v264 = vmul.f32 %v169, 0.375
  %v265 = vmul.f32 %v170, 0.375
  %v266 = vmul.f32 %v171, 0.375
  %v267 = vmul.f32 %v172, 0.375
  %v268 = vmul.f32 %v173, 0.375
  %v269 = vmul.f32 %v174, 0.375
  %v270 = vmul.f32 %v175, 0.375
  %v271 = vmul.f32 %v176, 0.375
  %v272 = vmul.f32 %v177, 0.375
  %v273 = vmul.f32 %v178, 0.375
  %v274 = vmul.f32 %v179, 0.375
  %v275 = vmul.f32 %v180, 0.375
  %v276 = vmul.f32 %v181, 0.375
  %v277 = vmul.f32 %v182, 0.375
  %v278 = vmul.f32 %v183, 0.375
  %v279 = vmul.f32 %v184, 0.375
  %v280 = vmul.f32 %v185, 0.375
  %v281 = vmul.f32 %v186, 0.375
  %v282 = vmul.f32 %v187, 0.375
  %v283 = vmul.f32 %v188, 0.375
  %vm341 = vcmask 1046528
  %v342 = vrot.slane %v227, 1
  %v343 = vrot.slane %v228, 1
  %v344 = vsel %vm341, %v342, %v343
  %v345 = vrot.slane %v229, 1
  %v346 = vsel %vm341, %v343, %v345
  %v347 = vrot.slane %v230, 1
  %v348 = vrot.slane %v231, 1
  %v349 = vsel %vm341, %v347, %v348
  %v350 = vrot.slane %v232, 1
  %v351 = vsel %vm341, %v348, %v350
  %v352 = vrot.slane %v233, 1
  %v353 = vrot.slane %v234, 1
  %v354 = vsel %vm341, %v352, %v353
  %v355 = vrot.slane %v235, 1
  %v356 = vsel %vm341, %v353, %v355
  %v357 = vrot.slane %v236, 1
  %v358 = vrot.slane %v237, 1
  %v359 = vsel %vm341, %v357, %v358
  %v360 = vrot.slane %v238, 1
  %v361 = vsel %vm341, %v358, %v360
  %v362 = vrot.slane %v239, 1
  %v363 = vrot.slane %v240, 1
  %v364 = vsel %vm341, %v362, %v363
  %v365 = vrot.slane %v241, 1
  %v366 = vsel %vm341, %v363, %v365
  %v367 = vrot.slane %v242, 1
  %v368 = vrot.slane %v243, 1
  %v369 = vsel %vm341, %v367, %v368
  %v370 = vrot.slane %v244, 1
  %v371 = vsel %vm341, %v368, %v370
  %v372 = vrot.slane %v245, 1
  %v373 = vrot.slane %v246, 1
  %v374 = vsel %vm341, %v372, %v373
  %v375 = vrot.slane %v247, 1
  %v376 = vsel %vm341, %v373, %v375
  %v377 = vrot.slane %v248, 1
  %v378 = vrot.slane %v249, 1
  %v379 = vsel %vm341, %v377, %v378
  %v380 = vrot.slane %v250, 1
  %v381 = vsel %vm341, %v378, %v380
  %v382 = vrot.slane %v251, 1
  %v383 = vrot.slane %v252, 1
  %v384 = vsel %vm341, %v382, %v383
  %v385 = vrot.slane %v253, 1
  %v386 = vsel %vm341, %v383, %v385
  %v387 = vrot.slane %v254, 1
  %v388 = vrot.slane %v255, 1
  %v389 = vsel %vm341, %v387, %v388
  %v390 = vrot.slane %v256, 1
  %v391 = vsel %vm341, %v388, %v390
  %v392 = vrot.slane %v257, 1
  %v393 = vrot.slane %v258, 1
  %v394 = vsel %vm341, %v392, %v393
  %v395 = vrot.slane %v259, 1
  %v396 = vsel %vm341, %v393, %v395
  %v397 = vrot.slane %v260, 1
  %v398 = vrot.slane %v261, 1
  %v399 = vsel %vm341, %v397, %v398
  %v400 = vrot.slane %v262, 1
  %v401 = vsel %vm341, %v398, %v400
  %v402 = vrot.slane %v263, 1
  %v403 = vrot.slane %v264, 1
  %v404 = vsel %vm341, %v402, %v403
  %v405 = vrot.slane %v265, 1
  %v406 = vsel %vm341, %v403, %v405
  %v407 = vrot.slane %v266, 1
  %v408 = vrot.slane %v267, 1
  %v409 = vsel %vm341, %v407, %v408
  %v410 = vrot.slane %v268, 1
  %v411 = vsel %vm341, %v408, %v410
  %v412 = vrot.slane %v269, 1
  %v413 = vrot.slane %v270, 1
  %v414 = vsel %vm341, %v412, %v413
  %v415 = vrot.slane %v271, 1
  %v416 = vsel %vm341, %v413, %v415
  %v417 = vrot.slane %v272, 1
  %v418 = vrot.slane %v273, 1
  %v419 = vsel %vm341, %v417, %v418
  %v420 = vrot.slane %v274, 1
  %v421 = vsel %vm341, %v418, %v420
  %v422 = vrot.slane %v275, 1
  %v423 = vrot.slane %v276, 1
  %v424 = vsel %vm341, %v422, %v423
  %v425 = vrot.slane %v277, 1
  %v426 = vsel %vm341, %v423, %v425
  %v427 = vrot.slane %v278, 1
  %v428 = vrot.slane %v279, 1
  %v429 = vsel %vm341, %v427, %v428
  %v430 = vrot.slane %v280, 1
  %v431 = vsel %vm341, %v428, %v430
  %v432 = vrot.slane %v281, 1
  %v433 = vrot.slane %v282, 1
  %v434 = vsel %vm341, %v432, %v433
  %v435 = vrot.slane %v283, 1
  %v436 = vsel %vm341, %v433, %v435
  %v475 = vadd.f32 %v189, %v344
  %v476 = vadd.f32 %v190, %v346
  %v477 = vadd.f32 %v191, %v349
  %v478 = vadd.f32 %v192, %v351
  %v479 = vadd.f32 %v193, %v354
  %v480 = vadd.f32 %v194, %v356
  %v481 = vadd.f32 %v195, %v359
  %v482 = vadd.f32 %v196, %v361
  %v483 = vadd.f32 %v197, %v364
  %v484 = vadd.f32 %v198, %v366
  %v485 = vadd.f32 %v199, %v369
  %v486 = vadd.f32 %v200, %v371
  %v487 = vadd.f32 %v201, %v374
  %v488 = vadd.f32 %v202, %v376
  %v489 = vadd.f32 %v203, %v379
  %v490 = vadd.f32 %v204, %v381
  %v491 = vadd.f32 %v205, %v384
  %v492 = vadd.f32 %v206, %v386
  %v493 = vadd.f32 %v207, %v389
  %v494 = vadd.f32 %v208, %v391
  %v495 = vadd.f32 %v209, %v394
  %v496 = vadd.f32 %v210, %v396
  %v497 = vadd.f32 %v211, %v399
  %v498 = vadd.f32 %v212, %v401
  %v499 = vadd.f32 %v213, %v404
  %v500 = vadd.f32 %v214, %v406
  %v501 = vadd.f32 %v215, %v409
  %v502 = vadd.f32 %v216, %v411
  %v503 = vadd.f32 %v217, %v414
  %v504 = vadd.f32 %v218, %v416
  %v505 = vadd.f32 %v219, %v419
  %v506 = vadd.f32 %v220, %v421
  %v507 = vadd.f32 %v221, %v424
  %v508 = vadd.f32 %v222, %v426
  %v509 = vadd.f32 %v223, %v429
  %v510 = vadd.f32 %v224, %v431
  %v511 = vadd.f32 %v225, %v434
  %v512 = vadd.f32 %v226, %v436
  %vm513 = vcmask 1045504
  %v514 = vrot.slane %v227, 2
  %v515 = vrot.slane %v228, 2
  %v516 = vsel %vm513, %v514, %v515
  %v517 = vrot.slane %v229, 2
  %v518 = vsel %vm513, %v515, %v517
  %v519 = vrot.slane %v230, 2
  %v520 = vrot.slane %v231, 2
  %v521 = vsel %vm513, %v519, %v520
  %v522 = vrot.slane %v232, 2
  %v523 = vsel %vm513, %v520, %v522
  %v524 = vrot.slane %v233, 2
  %v525 = vrot.slane %v234, 2
  %v526 = vsel %vm513, %v524, %v525
  %v527 = vrot.slane %v235, 2
  %v528 = vsel %vm513, %v525, %v527
  %v529 = vrot.slane %v236, 2
  %v530 = vrot.slane %v237, 2
  %v531 = vsel %vm513, %v529, %v530
  %v532 = vrot.slane %v238, 2
  %v533 = vsel %vm513, %v530, %v532
  %v534 = vrot.slane %v239, 2
  %v535 = vrot.slane %v240, 2
  %v536 = vsel %vm513, %v534, %v535
  %v537 = vrot.slane %v241, 2
  %v538 = vsel %vm513, %v535, %v537
  %v539 = vrot.slane %v242, 2
  %v540 = vrot.slane %v243, 2
  %v541 = vsel %vm513, %v539, %v540
  %v542 = vrot.slane %v244, 2
  %v543 = vsel %vm513, %v540, %v542
  %v544 = vrot.slane %v245, 2
  %v545 = vrot.slane %v246, 2
  %v546 = vsel %vm513, %v544, %v545
  %v547 = vrot.slane %v247, 2
  %v548 = vsel %vm513, %v545, %v547
  %v549 = vrot.slane %v248, 2
  %v550 = vrot.slane %v249, 2
  %v551 = vsel %vm513, %v549, %v550
  %v552 = vrot.slane %v250, 2
  %v553 = vsel %vm513, %v550, %v552
  %v554 = vrot.slane %v251, 2
  %v555 = vrot.slane %v252, 2
  %v556 = vsel %vm513, %v554, %v555
  %v557 = vrot.slane %v253, 2
  %v558 = vsel %vm513, %v555, %v557
  %v559 = vrot.slane %v254, 2
  %v560 = vrot.slane %v255, 2
  %v561 = vsel %vm513, %v559, %v560
  %v562 = vrot.slane %v256, 2
  %v563 = vsel %vm513, %v560, %v562
  %v564 = vrot.slane %v257, 2
  %v565 = vrot.slane %v258, 2
  %v566 = vsel %vm513, %v564, %v565
  %v567 = vrot.slane %v259, 2
  %v568 = vsel %vm513, %v565, %v567
  %v569 = vrot.slane %v260, 2
  %v570 = vrot.slane %v261, 2
  %v571 = vsel %vm513, %v569, %v570
  %v572 = vrot.slane %v262, 2
  %v573 = vsel %vm513, %v570, %v572
  %v574 = vrot.slane %v263, 2
  %v575 = vrot.slane %v264, 2
  %v576 = vsel %vm513, %v574, %v575
  %v577 = vrot.slane %v265, 2
  %v578 = vsel %vm513, %v575, %v577
  %v579 = vrot.slane %v266, 2
  %v580 = vrot.slane %v267, 2
  %v581 = vsel %vm513, %v579, %v580
  %v582 = vrot.slane %v268, 2
  %v583 = vsel %vm513, %v580, %v582
  %v584 = vrot.slane %v269, 2
  %v585 = vrot.slane %v270, 2
  %v586 = vsel %vm513, %v584, %v585
  %v587 = vrot.slane %v271, 2
  %v588 = vsel %vm513, %v585, %v587
  %v589 = vrot.slane %v272, 2
  %v590 = vrot.slane %v273, 2
  %v591 = vsel %vm513, %v589, %v590
  %v592 = vrot.slane %v274, 2
  %v593 = vsel %vm513, %v590, %v592
  %v594 = vrot.slane %v275, 2
  %v595 = vrot.slane %v276, 2
  %v596 = vsel %vm513, %v594, %v595
  %v597 = vrot.slane %v277, 2
  %v598 = vsel %vm513, %v595, %v597
  %v599 = vrot.slane %v278, 2
  %v600 = vrot.slane %v279, 2
  %v601 = vsel %vm513, %v599, %v600
  %v602 = vrot.slane %v280, 2
  %v603 = vsel %vm513, %v600, %v602
  %v604 = vrot.slane %v281, 2
  %v605 = vrot.slane %v282, 2
  %v606 = vsel %vm513, %v604, %v605
  %v607 = vrot.slane %v283, 2
  %v608 = vsel %vm513, %v605, %v607
  %v647 = vadd.f32 %v475, %v516
  %v648 = vadd.f32 %v476, %v518
  %v649 = vadd.f32 %v477, %v521
  %v650 = vadd.f32 %v478, %v523
  %v651 = vadd.f32 %v479, %v526
  %v652 = vadd.f32 %v480, %v528
  %v653 = vadd.f32 %v481, %v531
  %v654 = vadd.f32 %v482, %v533
  %v655 = vadd.f32 %v483, %v536
  %v656 = vadd.f32 %v484, %v538
  %v657 = vadd.f32 %v485, %v541
  %v658 = vadd.f32 %v486, %v543
  %v659 = vadd.f32 %v487, %v546
  %v660 = vadd.f32 %v488, %v548
  %v661 = vadd.f32 %v489, %v551
  %v662 = vadd.f32 %v490, %v553
  %v663 = vadd.f32 %v491, %v556
  %v664 = vadd.f32 %v492, %v558
  %v665 = vadd.f32 %v493, %v561
  %v666 = vadd.f32 %v494, %v563
  %v667 = vadd.f32 %v495, %v566
  %v668 = vadd.f32 %v496, %v568
  %v669 = vadd.f32 %v497, %v571
  %v670 = vadd.f32 %v498, %v573
  %v671 = vadd.f32 %v499, %v576
  %v672 = vadd.f32 %v500, %v578
  %v673 = vadd.f32 %v501, %v581
  %v674 = vadd.f32 %v502, %v583
  %v675 = vadd.f32 %v503, %v586
  %v676 = vadd.f32 %v504, %v588
  %v677 = vadd.f32 %v505, %v591
  %v678 = vadd.f32 %v506, %v593
  %v679 = vadd.f32 %v507, %v596
  %v680 = vadd.f32 %v508, %v598
  %v681 = vadd.f32 %v509, %v601
  %v682 = vadd.f32 %v510, %v603
  %v683 = vadd.f32 %v511, %v606
  %v684 = vadd.f32 %v512, %v608
  %v685 = vmul.f32 %v134, 0.125
  %v686 = vmul.f32 %v137, 0.125
  %v687 = vmul.f32 %v140, 0.125
  %v688 = vmul.f32 %v143, 0.125
  %v689 = vmul.f32 %v146, 0.125
  %v690 = vmul.f32 %v149, 0.125
  %v691 = vmul.f32 %v152, 0.125
  %v692 = vmul.f32 %v155, 0.125
  %v693 = vmul.f32 %v158, 0.125
  %v694 = vmul.f32 %v161, 0.125
  %v695 = vmul.f32 %v164, 0.125
  %v696 = vmul.f32 %v167, 0.125
  %v697 = vmul.f32 %v170, 0.125
  %v698 = vmul.f32 %v173, 0.125
  %v699 = vmul.f32 %v176, 0.125
  %v700 = vmul.f32 %v179, 0.125
  %v701 = vmul.f32 %v182, 0.125
  %v702 = vmul.f32 %v185, 0.125
  %v703 = vmul.f32 %v188, 0.125
  %vm761 = vcmask 1044480
  %v762 = vrot.slane %v189, 3
  %v763 = vrot.slane %v190, 3
  %v764 = vsel %vm761, %v762, %v763
  %v765 = vrot.slane %v685, 3
  %v766 = vsel %vm761, %v763, %v765
  %v767 = vrot.slane %v191, 3
  %v768 = vrot.slane %v192, 3
  %v769 = vsel %vm761, %v767, %v768
  %v770 = vrot.slane %v686, 3
  %v771 = vsel %vm761, %v768, %v770
  %v772 = vrot.slane %v193, 3
  %v773 = vrot.slane %v194, 3
  %v774 = vsel %vm761, %v772, %v773
  %v775 = vrot.slane %v687, 3
  %v776 = vsel %vm761, %v773, %v775
  %v777 = vrot.slane %v195, 3
  %v778 = vrot.slane %v196, 3
  %v779 = vsel %vm761, %v777, %v778
  %v780 = vrot.slane %v688, 3
  %v781 = vsel %vm761, %v778, %v780
  %v782 = vrot.slane %v197, 3
  %v783 = vrot.slane %v198, 3
  %v784 = vsel %vm761, %v782, %v783
  %v785 = vrot.slane %v689, 3
  %v786 = vsel %vm761, %v783, %v785
  %v787 = vrot.slane %v199, 3
  %v788 = vrot.slane %v200, 3
  %v789 = vsel %vm761, %v787, %v788
  %v790 = vrot.slane %v690, 3
  %v791 = vsel %vm761, %v788, %v790
  %v792 = vrot.slane %v201, 3
  %v793 = vrot.slane %v202, 3
  %v794 = vsel %vm761, %v792, %v793
  %v795 = vrot.slane %v691, 3
  %v796 = vsel %vm761, %v793, %v795
  %v797 = vrot.slane %v203, 3
  %v798 = vrot.slane %v204, 3
  %v799 = vsel %vm761, %v797, %v798
  %v800 = vrot.slane %v692, 3
  %v801 = vsel %vm761, %v798, %v800
  %v802 = vrot.slane %v205, 3
  %v803 = vrot.slane %v206, 3
  %v804 = vsel %vm761, %v802, %v803
  %v805 = vrot.slane %v693, 3
  %v806 = vsel %vm761, %v803, %v805
  %v807 = vrot.slane %v207, 3
  %v808 = vrot.slane %v208, 3
  %v809 = vsel %vm761, %v807, %v808
  %v810 = vrot.slane %v694, 3
  %v811 = vsel %vm761, %v808, %v810
  %v812 = vrot.slane %v209, 3
  %v813 = vrot.slane %v210, 3
  %v814 = vsel %vm761, %v812, %v813
  %v815 = vrot.slane %v695, 3
  %v816 = vsel %vm761, %v813, %v815
  %v817 = vrot.slane %v211, 3
  %v818 = vrot.slane %v212, 3
  %v819 = vsel %vm761, %v817, %v818
  %v820 = vrot.slane %v696, 3
  %v821 = vsel %vm761, %v818, %v820
  %v822 = vrot.slane %v213, 3
  %v823 = vrot.slane %v214, 3
  %v824 = vsel %vm761, %v822, %v823
  %v825 = vrot.slane %v697, 3
  %v826 = vsel %vm761, %v823, %v825
  %v827 = vrot.slane %v215, 3
  %v828 = vrot.slane %v216, 3
  %v829 = vsel %vm761, %v827, %v828
  %v830 = vrot.slane %v698, 3
  %v831 = vsel %vm761, %v828, %v830
  %v832 = vrot.slane %v217, 3
  %v833 = vrot.slane %v218, 3
  %v834 = vsel %vm761, %v832, %v833
  %v835 = vrot.slane %v699, 3
  %v836 = vsel %vm761, %v833, %v835
  %v837 = vrot.slane %v219, 3
  %v838 = vrot.slane %v220, 3
  %v839 = vsel %vm761, %v837, %v838
  %v840 = vrot.slane %v700, 3
  %v841 = vsel %vm761, %v838, %v840
  %v842 = vrot.slane %v221, 3
  %v843 = vrot.slane %v222, 3
  %v844 = vsel %vm761, %v842, %v843
  %v845 = vrot.slane %v701, 3
  %v846 = vsel %vm761, %v843, %v845
  %v847 = vrot.slane %v223, 3
  %v848 = vrot.slane %v224, 3
  %v849 = vsel %vm761, %v847, %v848
  %v850 = vrot.slane %v702, 3
  %v851 = vsel %vm761, %v848, %v850
  %v852 = vrot.slane %v225, 3
  %v853 = vrot.slane %v226, 3
  %v854 = vsel %vm761, %v852, %v853
  %v855 = vrot.slane %v703, 3
  %v856 = vsel %vm761, %v853, %v855
  %v895 = vadd.f32 %v647, %v764
  %v896 = vadd.f32 %v648, %v766
  %v897 = vadd.f32 %v649, %v769
  %v898 = vadd.f32 %v650, %v771
  %v899 = vadd.f32 %v651, %v774
  %v900 = vadd.f32 %v652, %v776
  %v901 = vadd.f32 %v653, %v779
  %v902 = vadd.f32 %v654, %v781
  %v903 = vadd.f32 %v655, %v784
  %v904 = vadd.f32 %v656, %v786
  %v905 = vadd.f32 %v657, %v789
  %v906 = vadd.f32 %v658, %v791
  %v907 = vadd.f32 %v659, %v794
  %v908 = vadd.f32 %v660, %v796
  %v909 = vadd.f32 %v661, %v799
  %v910 = vadd.f32 %v662, %v801
  %v911 = vadd.f32 %v663, %v804
  %v912 = vadd.f32 %v664, %v806
  %v913 = vadd.f32 %v665, %v809
  %v914 = vadd.f32 %v666, %v811
  %v915 = vadd.f32 %v667, %v814
  %v916 = vadd.f32 %v668, %v816
  %v917 = vadd.f32 %v669, %v819
  %v918 = vadd.f32 %v670, %v821
  %v919 = vadd.f32 %v671, %v824
  %v920 = vadd.f32 %v672, %v826
  %v921 = vadd.f32 %v673, %v829
  %v922 = vadd.f32 %v674, %v831
  %v923 = vadd.f32 %v675, %v834
  %v924 = vadd.f32 %v676, %v836
  %v925 = vadd.f32 %v677, %v839
  %v926 = vadd.f32 %v678, %v841
  %v927 = vadd.f32 %v679, %v844
  %v928 = vadd.f32 %v680, %v846
  %v929 = vadd.f32 %v681, %v849
  %v930 = vadd.f32 %v682, %v851
  %v931 = vadd.f32 %v683, %v854
  %v932 = vadd.f32 %v684, %v856
  %v933 = vmul.f32 %v895, 0.125
  %v934 = vmul.f32 %v896, 0.125
  %v935 = vmul.f32 %v897, 0.125
  %v936 = vmul.f32 %v898, 0.125
  %v937 = vmul.f32 %v899, 0.125
  %v938 = vmul.f32 %v900, 0.125
  %v939 = vmul.f32 %v901, 0.125
  %v940 = vmul.f32 %v902, 0.125
  %v941 = vmul.f32 %v903, 0.125
  %v942 = vmul.f32 %v904, 0.125
  %v943 = vmul.f32 %v905, 0.125
  %v944 = vmul.f32 %v906, 0.125
  %v945 = vmul.f32 %v907, 0.125
  %v946 = vmul.f32 %v908, 0.125
  %v947 = vmul.f32 %v909, 0.125
  %v948 = vmul.f32 %v910, 0.125
  %v949 = vmul.f32 %v911, 0.125
  %v950 = vmul.f32 %v912, 0.125
  %v951 = vmul.f32 %v913, 0.125
  %v952 = vmul.f32 %v914, 0.125
  %v953 = vmul.f32 %v915, 0.125
  %v954 = vmul.f32 %v916, 0.125
  %v955 = vmul.f32 %v917, 0.125
  %v956 = vmul.f32 %v918, 0.125
  %v957 = vmul.f32 %v919, 0.125
  %v958 = vmul.f32 %v920, 0.125
  %v959 = vmul.f32 %v921, 0.125
  %v960 = vmul.f32 %v922, 0.125
  %v961 = vmul.f32 %v923, 0.125
  %v962 = vmul.f32 %v924, 0.125
  %v963 = vmul.f32 %v925, 0.125
  %v964 = vmul.f32 %v926, 0.125
  %v965 = vmul.f32 %v897, 0.375
  %v966 = vmul.f32 %v898, 0.375
  %v967 = vmul.f32 %v899, 0.375
  %v968 = vmul.f32 %v900, 0.375
  %v969 = vmul.f32 %v901, 0.375
  %v970 = vmul.f32 %v902, 0.375
  %v971 = vmul.f32 %v903, 0.375
  %v972 = vmul.f32 %v904, 0.375
  %v973 = vmul.f32 %v905, 0.375
  %v974 = vmul.f32 %v906, 0.375
  %v975 = vmul.f32 %v907, 0.375
  %v976 = vmul.f32 %v908, 0.375
  %v977 = vmul.f32 %v909, 0.375
  %v978 = vmul.f32 %v910, 0.375
  %v979 = vmul.f32 %v911, 0.375
  %v980 = vmul.f32 %v912, 0.375
  %v981 = vmul.f32 %v913, 0.375
  %v982 = vmul.f32 %v914, 0.375
  %v983 = vmul.f32 %v915, 0.375
  %v984 = vmul.f32 %v916, 0.375
  %v985 = vmul.f32 %v917, 0.375
  %v986 = vmul.f32 %v918, 0.375
  %v987 = vmul.f32 %v919, 0.375
  %v988 = vmul.f32 %v920, 0.375
  %v989 = vmul.f32 %v921, 0.375
  %v990 = vmul.f32 %v922, 0.375
  %v991 = vmul.f32 %v923, 0.375
  %v992 = vmul.f32 %v924, 0.375
  %v993 = vmul.f32 %v925, 0.375
  %v994 = vmul.f32 %v926, 0.375
  %v995 = vmul.f32 %v927, 0.375
  %v996 = vmul.f32 %v928, 0.375
  %v997 = vadd.f32 %v933, %v965
  %v998 = vadd.f32 %v934, %v966
  %v999 = vadd.f32 %v935, %v967
  %v1000 = vadd.f32 %v936, %v968
  %v1001 = vadd.f32 %v937, %v969
  %v1002 = vadd.f32 %v938, %v970
  %v1003 = vadd.f32 %v939, %v971
  %v1004 = vadd.f32 %v940, %v972
  %v1005 = vadd.f32 %v941, %v973
  %v1006 = vadd.f32 %v942, %v974
  %v1007 = vadd.f32 %v943, %v975
  %v1008 = vadd.f32 %v944, %v976
  %v1009 = vadd.f32 %v945, %v977
  %v1010 = vadd.f32 %v946, %v978
  %v1011 = vadd.f32 %v947, %v979
  %v1012 = vadd.f32 %v948, %v980
  %v1013 = vadd.f32 %v949, %v981
  %v1014 = vadd.f32 %v950, %v982
  %v1015 = vadd.f32 %v951, %v983
  %v1016 = vadd.f32 %v952, %v984
  %v1017 = vadd.f32 %v953, %v985
  %v1018 = vadd.f32 %v954, %v986
  %v1019 = vadd.f32 %v955, %v987
  %v1020 = vadd.f32 %v956, %v988
  %v1021 = vadd.f32 %v957, %v989
  %v1022 = vadd.f32 %v958, %v990
  %v1023 = vadd.f32 %v959, %v991
  %v1024 = vadd.f32 %v960, %v992
  %v1025 = vadd.f32 %v961, %v993
  %v1026 = vadd.f32 %v962, %v994
  %v1027 = vadd.f32 %v963, %v995
  %v1028 = vadd.f32 %v964, %v996
  %v1029 = vmul.f32 %v929, 0.375
  %v1030 = vmul.f32 %v930, 0.375
  %v1031 = vadd.f32 %v997, %v967
  %v1032 = vadd.f32 %v998, %v968
  %v1033 = vadd.f32 %v999, %v969
  %v1034 = vadd.f32 %v1000, %v970
  %v1035 = vadd.f32 %v1001, %v971
  %v1036 = vadd.f32 %v1002, %v972
  %v1037 = vadd.f32 %v1003, %v973
  %v1038 = vadd.f32 %v1004, %v974
  %v1039 = vadd.f32 %v1005, %v975
  %v1040 = vadd.f32 %v1006, %v976
  %v1041 = vadd.f32 %v1007, %v977
  %v1042 = vadd.f32 %v1008, %v978
  %v1043 = vadd.f32 %v1009, %v979
  %v1044 = vadd.f32 %v1010, %v980
  %v1045 = vadd.f32 %v1011, %v981
  %v1046 = vadd.f32 %v1012, %v982
  %v1047 = vadd.f32 %v1013, %v983
  %v1048 = vadd.f32 %v1014, %v984
  %v1049 = vadd.f32 %v1015, %v985
  %v1050 = vadd.f32 %v1016, %v986
  %v1051 = vadd.f32 %v1017, %v987
  %v1052 = vadd.f32 %v1018, %v988
  %v1053 = vadd.f32 %v1019, %v989
  %v1054 = vadd.f32 %v1020, %v990
  %v1055 = vadd.f32 %v1021, %v991
  %v1056 = vadd.f32 %v1022, %v992
  %v1057 = vadd.f32 %v1023, %v993
  %v1058 = vadd.f32 %v1024, %v994
  %v1059 = vadd.f32 %v1025, %v995
  %v1060 = vadd.f32 %v1026, %v996
  %v1061 = vadd.f32 %v1027, %v1029
  %v1062 = vadd.f32 %v1028, %v1030
  %v1063 = vmul.f32 %v927, 0.125
  %v1064 = vmul.f32 %v928, 0.125
  %v1065 = vmul.f32 %v929, 0.125
  %v1066 = vmul.f32 %v930, 0.125
  %v1067 = vmul.f32 %v931, 0.125
  %v1068 = vmul.f32 %v932, 0.125
  %v1069 = vadd.f32 %v1031, %v939
  %v1070 = vadd.f32 %v1032, %v940
  %v1071 = vadd.f32 %v1033, %v941
  %v1072 = vadd.f32 %v1034, %v942
  %v1073 = vadd.f32 %v1035, %v943
  %v1074 = vadd.f32 %v1036, %v944
  %v1075 = vadd.f32 %v1037, %v945
  %v1076 = vadd.f32 %v1038, %v946
  %v1077 = vadd.f32 %v1039, %v947
  %v1078 = vadd.f32 %v1040, %v948
  %v1079 = vadd.f32 %v1041, %v949
  %v1080 = vadd.f32 %v1042, %v950
  %v1081 = vadd.f32 %v1043, %v951
  %v1082 = vadd.f32 %v1044, %v952
  %v1083 = vadd.f32 %v1045, %v953
  %v1084 = vadd.f32 %v1046, %v954
  %v1085 = vadd.f32 %v1047, %v955
  %v1086 = vadd.f32 %v1048, %v956
  %v1087 = vadd.f32 %v1049, %v957
  %v1088 = vadd.f32 %v1050, %v958
  %v1089 = vadd.f32 %v1051, %v959
  %v1090 = vadd.f32 %v1052, %v960
  %v1091 = vadd.f32 %v1053, %v961
  %v1092 = vadd.f32 %v1054, %v962
  %v1093 = vadd.f32 %v1055, %v963
  %v1094 = vadd.f32 %v1056, %v964
  %v1095 = vadd.f32 %v1057, %v1063
  %v1096 = vadd.f32 %v1058, %v1064
  %v1097 = vadd.f32 %v1059, %v1065
  %v1098 = vadd.f32 %v1060, %v1066
  %v1099 = vadd.f32 %v1061, %v1067
  %v1100 = vadd.f32 %v1062, %v1068
  %1101 = vst.msk [vmem:[%s1] sm:$0xff] %vm8, %v1069
  %1102 = vst.msk [vmem:[%s1 + $0x8] sm:$0xff] %vm8, %v1070
  %1103 = vst.msk [vmem:[%s1 + $0x10] sm:$0xff] %vm8, %v1071
  %1104 = vst.msk [vmem:[%s1 + $0x18] sm:$0xff] %vm8, %v1072
  %1105 = vst.msk [vmem:[%s1 + $0x20] sm:$0xff] %vm8, %v1073
  %1106 = vst.msk [vmem:[%s1 + $0x28] sm:$0xff] %vm8, %v1074
  %1107 = vst.msk [vmem:[%s1 + $0x30] sm:$0xff] %vm8, %v1075
  %1108 = vst.msk [vmem:[%s1 + $0x38] sm:$0xff] %vm8, %v1076
  %1109 = vst.msk [vmem:[%s1 + $0x40] sm:$0xff] %vm8, %v1077
  %1110 = vst.msk [vmem:[%s1 + $0x48] sm:$0xff] %vm8, %v1078
  %1111 = vst.msk [vmem:[%s1 + $0x50] sm:$0xff] %vm8, %v1079
  %1112 = vst.msk [vmem:[%s1 + $0x58] sm:$0xff] %vm8, %v1080
  %1113 = vst.msk [vmem:[%s1 + $0x60] sm:$0xff] %vm8, %v1081
  %1114 = vst.msk [vmem:[%s1 + $0x68] sm:$0xff] %vm8, %v1082
  %1115 = vst.msk [vmem:[%s1 + $0x70] sm:$0xff] %vm8, %v1083
  %1116 = vst.msk [vmem:[%s1 + $0x78] sm:$0xff] %vm8, %v1084
  %1117 = vst.msk [vmem:[%s1 + $0x80] sm:$0xff] %vm8, %v1085
  %1118 = vst.msk [vmem:[%s1 + $0x88] sm:$0xff] %vm8, %v1086
  %1119 = vst.msk [vmem:[%s1 + $0x90] sm:$0xff] %vm8, %v1087
  %1120 = vst.msk [vmem:[%s1 + $0x98] sm:$0xff] %vm8, %v1088
  %1121 = vst.msk [vmem:[%s1 + $0xa0] sm:$0xff] %vm8, %v1089
  %1122 = vst.msk [vmem:[%s1 + $0xa8] sm:$0xff] %vm8, %v1090
  %1123 = vst.msk [vmem:[%s1 + $0xb0] sm:$0xff] %vm8, %v1091
  %1124 = vst.msk [vmem:[%s1 + $0xb8] sm:$0xff] %vm8, %v1092
  %1125 = vst.msk [vmem:[%s1 + $0xc0] sm:$0xff] %vm8, %v1093
  %1126 = vst.msk [vmem:[%s1 + $0xc8] sm:$0xff] %vm8, %v1094
  %1127 = vst.msk [vmem:[%s1 + $0xd0] sm:$0xff] %vm8, %v1095
  %1128 = vst.msk [vmem:[%s1 + $0xd8] sm:$0xff] %vm8, %v1096
  %1129 = vst.msk [vmem:[%s1 + $0xe0] sm:$0xff] %vm8, %v1097
  %1130 = vst.msk [vmem:[%s1 + $0xe8] sm:$0xff] %vm8, %v1098
  %1131 = vst.msk [vmem:[%s1 + $0xf0] sm:$0xff] %vm8, %v1099
  %1132 = vst.msk [vmem:[%s1 + $0xf8] sm:$0xff] %vm8, %v1100
  // Predicated region
  $region6: #{tpu_custom_call.1} parent=0 // pred_check
    _
  $region7: #{tpu_custom_call.1} parent=0 // pred_check_branch
    %1134 = sbr.rel (0) target = $region9
  $region8: #{tpu_custom_call.1} parent=0 // pred_region
    _
  $region9: #{tpu_custom_call.1} parent=0 // pred_fallthru
    _
  // Predicated region
  $region10: #{tpu_custom_call.1} parent=0 // pred_check
    _
  $region11: #{tpu_custom_call.1} parent=0 // pred_check_branch
    %1136 = sbr.rel (0) target = $region13
  $region12: #{tpu_custom_call.1} parent=0 // pred_region
    _
  $region13: #{tpu_custom_call.1} parent=0 // pred_fallthru
    _

</llo_original>
